<compile_context>
chip_gen: v6e
topology: v6e:2x2x1
jax: 0.10.0
libtpu: 0.0.40
codegen_flags: <defaults>
</compile_context>

<pallas_src>
import functools

import jax
import jax.numpy as jnp
from jax.experimental import pallas as pl
from jax.experimental.pallas import tpu as pltpu

LANE = 128                    # TPU lane width (last dim)
SUBLANE = 16                  # bf16 sublane packing (second-to-last dim)
MAX_BATCH_TILE = 512          # rows per batch tile
RESIDENT_VMEM_BUDGET = 24 * 1024 * 1024   # for 2x-buffered resident weights


def _round_up(x, m):
    return (x + m - 1) // m * m


def _cdiv(a, b):
    return -(-a // b)


def _feature_pad(d):
    """Lane-dense padding.  Pad to multiples of 256 (when >128) so K/N fill
    the 2x256x256 MXU on v6e/v7x; 128 is native on v5e and cheaper for tiny
    dims."""
    p = _round_up(d, LANE)
    if p > LANE:
        p = _round_up(p, 2 * LANE)
    return p


def _vmem_limit_bytes():
    """Explicit scoped-VMEM limit: ~85% of physical (default scoped limits on
    v5e/v6e are only 16/32 MiB of 128 MiB)."""
    try:
        cap = getattr(pltpu.get_tpu_info(), "vmem_capacity_bytes",
                      64 * 1024 * 1024)
    except Exception:
        cap = 64 * 1024 * 1024       # smallest across v5e / v6e / v7x
    return int(cap * 0.85)


def _pick_batch_tiling(batch, min_tiles=1):
    """Choose (b_tile, n_tiles) with minimal padding, tile <= MAX_BATCH_TILE."""
    b16 = _round_up(batch, SUBLANE)
    n_tiles = max(min_tiles, _cdiv(b16, MAX_BATCH_TILE))
    b_tile = _round_up(_cdiv(b16, n_tiles), SUBLANE)
    return b_tile, n_tiles


# ---------------------------------------------------------------------------
# Resident-weight kernels: all padded weights live in VMEM for the whole
# call; the layer loop is unrolled inside a single grid step (grid = batch
# tiles only).  Weights are DMA'd from HBM exactly once.
# ---------------------------------------------------------------------------
def _resident_kernel_multi(x_ref, w0_ref, wh_ref, b_ref, o_ref):
    n_layers = b_ref.shape[0]
    act = jnp.maximum(
        jnp.dot(x_ref[...], w0_ref[...], preferred_element_type=jnp.float32)
        + b_ref[0], 0.0)
    for l in range(1, n_layers):
        act = jnp.maximum(
            jnp.dot(act.astype(jnp.bfloat16), wh_ref[l - 1],
                    preferred_element_type=jnp.float32) + b_ref[l], 0.0)
    o_ref[...] = act.astype(o_ref.dtype)


def _resident_kernel_single(x_ref, w0_ref, b_ref, o_ref):
    o_ref[...] = jnp.maximum(
        jnp.dot(x_ref[...], w0_ref[...], preferred_element_type=jnp.float32)
        + b_ref[0], 0.0).astype(o_ref.dtype)


@functools.partial(jax.jit, static_argnames=("d_in", "d_hidden"))
def _forward_resident(x, w0, wh, b, *, d_in, d_hidden):
    B = x.shape[0]
    din_pad, d_pad = w0.shape
    n_layers = b.shape[0]

    # >=2 batch tiles when there is enough work so the "parallel" axis can
    # shard across v7x's 2 TensorCores; with resident weights the extra tile
    # adds no weight traffic (and is harmless on 1-TC v5e/v6e).
    min_tiles = 2 if _round_up(B, SUBLANE) >= 256 else 1
    b_tile, n_tiles = _pick_batch_tiling(B, min_tiles=min_tiles)
    b_pad = b_tile * n_tiles

    x_p = (jnp.zeros((b_pad, din_pad), jnp.bfloat16)
           .at[:B, :d_in].set(x.astype(jnp.bfloat16)))

    if wh is None:
        kernel = _resident_kernel_single
        operands = (x_p, w0, b)
        in_specs = [
            pl.BlockSpec((b_tile, din_pad), lambda bi: (bi, 0)),
            pl.BlockSpec((din_pad, d_pad), lambda bi: (0, 0)),
            pl.BlockSpec((n_layers, 1, d_pad), lambda bi: (0, 0, 0)),
        ]
    else:
        kernel = _resident_kernel_multi
        operands = (x_p, w0, wh, b)
        in_specs = [
            pl.BlockSpec((b_tile, din_pad), lambda bi: (bi, 0)),
            pl.BlockSpec((din_pad, d_pad), lambda bi: (0, 0)),
            pl.BlockSpec((n_layers - 1, d_pad, d_pad), lambda bi: (0, 0, 0)),
            pl.BlockSpec((n_layers, 1, d_pad), lambda bi: (0, 0, 0)),
        ]

    out = pl.pallas_call(
        kernel,
        out_shape=jax.ShapeDtypeStruct((b_pad, d_pad), jnp.float32),
        grid=(n_tiles,),
        in_specs=in_specs,
        out_specs=pl.BlockSpec((b_tile, d_pad), lambda bi: (bi, 0)),
        compiler_params=pltpu.CompilerParams(
            dimension_semantics=("parallel",),
            vmem_limit_bytes=_vmem_limit_bytes(),
        ),
    )(*operands)

    return out[:B, :d_hidden]


# ---------------------------------------------------------------------------
# Streamed fallback for models whose weights do not fit in VMEM.
# grid = (batch_tiles, n_layers); activation stays resident in VMEM scratch
# across the layer axis, per-layer weight tiles are streamed (double-buffered
# by the BlockSpec pipeline).
# TODO(synk): add (N, K) tiling of the per-layer weight (third grid axis) for
# d_pad >= ~2816 so the double-buffered weight still fits v7x's 64 MiB VMEM.
# ---------------------------------------------------------------------------
def _streamed_kernel(x_ref, w_ref, b_ref, o_ref, h_ref):
    layer = pl.program_id(1)
    last = pl.num_programs(1) - 1

    @pl.when(layer == 0)
    def _():
        h_ref[...] = x_ref[...]

    acc = jnp.dot(h_ref[...], w_ref[...], preferred_element_type=jnp.float32)
    act = jnp.maximum(acc + b_ref[...], 0.0)

    @pl.when(layer < last)           # last layer's activation is never read
    def _():
        h_ref[...] = act.astype(h_ref.dtype)

    @pl.when(layer == last)
    def _():
        o_ref[...] = act.astype(o_ref.dtype)


@functools.partial(jax.jit, static_argnames=("d_in", "d_hidden"))
def _forward_streamed(x, w, b, *, d_in, d_hidden):
    B = x.shape[0]
    n_layers, d_sq, _ = w.shape
    b_tile, n_tiles = _pick_batch_tiling(B)
    b_pad = b_tile * n_tiles

    x_p = (jnp.zeros((b_pad, d_sq), jnp.bfloat16)
           .at[:B, :d_in].set(x.astype(jnp.bfloat16)))

    out = pl.pallas_call(
        _streamed_kernel,
        out_shape=jax.ShapeDtypeStruct((b_pad, d_sq), jnp.float32),
        grid=(n_tiles, n_layers),
        in_specs=[
            pl.BlockSpec((b_tile, d_sq), lambda bi, l: (bi, 0)),
            pl.BlockSpec((None, d_sq, d_sq), lambda bi, l: (l, 0, 0)),
            pl.BlockSpec((None, 1, d_sq), lambda bi, l: (l, 0, 0)),
        ],
        out_specs=pl.BlockSpec((b_tile, d_sq), lambda bi, l: (bi, 0)),
        scratch_shapes=[pltpu.VMEM((b_tile, d_sq), jnp.bfloat16)],
        compiler_params=pltpu.CompilerParams(
            dimension_semantics=("parallel", "arbitrary"),
            vmem_limit_bytes=_vmem_limit_bytes(),
        ),
    )(x_p, w, b)

    return out[:B, :d_hidden]


# ---------------------------------------------------------------------------
# Packing (done ONCE, outside the per-call path) + dispatch wrapper.
# ---------------------------------------------------------------------------
def pack_lazy_mlp_params(params):
    """params[l] = (w: (d_in_l, d_out) f32, b: (d_out,) f32); w is stored as
    (in, out) so the kernel computes x @ W + b.  Pads, casts to bf16 and
    stacks once; chooses resident vs. streamed layout by VMEM footprint."""
    n_layers = len(params)
    d_in = params[0][0].shape[0]
    d_hidden = params[0][0].shape[1]
    din_pad = _feature_pad(d_in)
    d_pad = _feature_pad(d_hidden)

    # Conservative budget: assume the pipeline double-buffers resident blocks.
    resident_bytes = 2 * 2 * (din_pad * d_pad
                              + max(n_layers - 1, 0) * d_pad * d_pad)
    mode = "resident" if resident_bytes <= RESIDENT_VMEM_BUDGET else "streamed"

    if mode == "resident":
        w0, _ = params[0]
        w0_p = (jnp.zeros((din_pad, d_pad), jnp.bfloat16)
                .at[:d_in, :d_hidden].set(w0.astype(jnp.bfloat16)))
        if n_layers > 1:
            wh_p = jnp.stack([
                jnp.zeros((d_pad, d_pad), jnp.bfloat16)
                .at[:w.shape[0], :w.shape[1]].set(w.astype(jnp.bfloat16))
                for (w, _) in params[1:]])
        else:
            wh_p = None
        b_p = jnp.stack([
            jnp.zeros((1, d_pad), jnp.float32)
            .at[0, :bb.shape[0]].set(bb.astype(jnp.float32))
            for (_, bb) in params])
        arrays = {"w0": w0_p, "wh": wh_p, "b": b_p}
    else:
        d_sq = max(din_pad, d_pad)
        w_p = jnp.stack([
            jnp.zeros((d_sq, d_sq), jnp.bfloat16)
            .at[:w.shape[0], :w.shape[1]].set(w.astype(jnp.bfloat16))
            for (w, _) in params])
        b_p = jnp.stack([
            jnp.zeros((1, d_sq), jnp.float32)
            .at[0, :bb.shape[0]].set(bb.astype(jnp.float32))
            for (_, bb) in params])
        arrays = {"w": w_p, "b": b_p}

    meta = {"mode": mode, "d_in": d_in, "d_hidden": d_hidden}
    return arrays, meta


def lazy_mlp_forward(x, packed):
    arrays, meta = packed
    if meta["mode"] == "resident":
        return _forward_resident(x, arrays["w0"], arrays["wh"], arrays["b"],
                                 d_in=meta["d_in"], d_hidden=meta["d_hidden"])
    return _forward_streamed(x, arrays["w"], arrays["b"],
                             d_in=meta["d_in"], d_hidden=meta["d_hidden"])


# ---------------------------------------------------------------------------
# Init + reference.
# ---------------------------------------------------------------------------
def init_lazy_mlp_params(key, input_size, dim_hidden, n_layers,
                         dtype=jnp.float32):
    """Deterministic init mimicking PyTorch Linear/LazyLinear default:
    U(-1/sqrt(fan_in), 1/sqrt(fan_in)) for weight and bias; weights stored as
    (in, out)."""
    params = []
    in_dim = input_size
    for _ in range(n_layers):
        key, kw, kb = jax.random.split(key, 3)
        bound = 1.0 / (in_dim ** 0.5)
        w = jax.random.uniform(kw, (in_dim, dim_hidden), dtype,
                               minval=-bound, maxval=bound)
        b = jax.random.uniform(kb, (dim_hidden,), dtype,
                               minval=-bound, maxval=bound)
        params.append((w, b))
        in_dim = dim_hidden
    return params


def lazy_mlp_reference(x, params):
    """Pure-JAX reference mirroring the kernel's numerics (bf16 operands,
    f32 accumulate, f32 bias + ReLU after every layer)."""
    h = x.astype(jnp.bfloat16)
    act = None
    for (w, b) in params:
        acc = jnp.dot(h, w.astype(jnp.bfloat16),
                      preferred_element_type=jnp.float32)
        act = jnp.maximum(acc + b.astype(jnp.float32), 0.0)
        h = act.astype(jnp.bfloat16)
    return act


if __name__ == "__main__":
    key = jax.random.PRNGKey(0)
    k_x, k_p = jax.random.split(key)

    batch = 8
    input_size = 16
    dim_hidden = 32
    n_layers = 3

    x = jax.random.normal(k_x, (batch, input_size), jnp.float32)
    params = init_lazy_mlp_params(k_p, input_size, dim_hidden, n_layers)
    packed = pack_lazy_mlp_params(params)   # pack once, outside the hot path

    out = lazy_mlp_forward(x, packed)
    out = jax.block_until_ready(out)

    ref = lazy_mlp_reference(x, params)
    assert out.shape == (batch, dim_hidden)
    max_err = float(jnp.max(jnp.abs(out - ref)))
    assert max_err < 1e-2, f"max abs error {max_err}"

    print("KERNEL_OK")
</pallas_src>

<mosaic_0001>
module attributes {stable_mosaic.version = 11 : i64} {
  func.func @_resident_kernel_multi(%arg0: i32, %arg1: memref<16x128xbf16, #tpu.memory_space<vmem>>, %arg2: memref<128x128xbf16, #tpu.memory_space<vmem>>, %arg3: memref<2x128x128xbf16, #tpu.memory_space<vmem>>, %arg4: memref<3x1x128xf32, #tpu.memory_space<vmem>>, %arg5: memref<16x128xf32, #tpu.memory_space<vmem>>) attributes {dimension_semantics = [#tpu.dimension_semantics<parallel>], iteration_bounds = array<i64: 1>, scalar_prefetch = 0 : i64, scratch_operands = 0 : i64, tpu.core_type = #tpu.core_type<tc>, window_params = [{transform_indices = @transform_0, window_bounds = array<i64: 16, 128>}, {pipeline_mode = #tpu.pipeline_mode<synchronous>, transform_indices = @transform_1, window_bounds = array<i64: 128, 128>}, {pipeline_mode = #tpu.pipeline_mode<synchronous>, transform_indices = @transform_2, window_bounds = array<i64: 2, 128, 128>}, {pipeline_mode = #tpu.pipeline_mode<synchronous>, transform_indices = @transform_3, window_bounds = array<i64: 3, 1, 128>}, {transform_indices = @transform_4, window_bounds = array<i64: 16, 128>}]} {
    %c0 = arith.constant 0 : index
    %c0_0 = arith.constant 0 : index
    %0 = vector.load %arg1[%c0, %c0_0] : memref<16x128xbf16, #tpu.memory_space<vmem>>, vector<16x128xbf16>
    %c0_1 = arith.constant 0 : index
    %c0_2 = arith.constant 0 : index
    %1 = vector.load %arg2[%c0_1, %c0_2] : memref<128x128xbf16, #tpu.memory_space<vmem>>, vector<128x128xbf16>
    %cst = arith.constant dense<0.000000e+00> : vector<16x128xf32>
    %2 = tpu.matmul %0, %1, %cst {dimension_numbers = #tpu.dot_dimension_numbers<[1], [0], [0], [1], [0, 0, 1, 1], [], []>} : vector<16x128xbf16>, vector<128x128xbf16>, vector<16x128xf32> -> vector<16x128xf32>
    %c0_3 = arith.constant 0 : index
    %c0_4 = arith.constant 0 : index
    %c0_5 = arith.constant 0 : index
    %3 = vector.load %arg4[%c0_3, %c0_4, %c0_5] : memref<3x1x128xf32, #tpu.memory_space<vmem>>, vector<1x1x128xf32>
    %4 = vector.shape_cast %3 : vector<1x1x128xf32> to vector<1x128xf32>
    %5 = vector.broadcast %4 : vector<1x128xf32> to vector<16x128xf32>
    %6 = arith.addf %2, %5 : vector<16x128xf32>
    %cst_6 = arith.constant 0.000000e+00 : f32
    %7 = vector.broadcast %cst_6 : f32 to vector<16x128xf32>
    %8 = arith.maximumf %6, %7 : vector<16x128xf32>
    %9 = arith.truncf %8 : vector<16x128xf32> to vector<16x128xbf16>
    %c0_7 = arith.constant 0 : index
    %c0_8 = arith.constant 0 : index
    %c0_9 = arith.constant 0 : index
    %10 = vector.load %arg3[%c0_7, %c0_8, %c0_9] : memref<2x128x128xbf16, #tpu.memory_space<vmem>>, vector<1x128x128xbf16>
    %11 = vector.shape_cast %10 : vector<1x128x128xbf16> to vector<128x128xbf16>
    %cst_10 = arith.constant dense<0.000000e+00> : vector<16x128xf32>
    %12 = tpu.matmul %9, %11, %cst_10 {dimension_numbers = #tpu.dot_dimension_numbers<[1], [0], [0], [1], [0, 0, 1, 1], [], []>} : vector<16x128xbf16>, vector<128x128xbf16>, vector<16x128xf32> -> vector<16x128xf32>
    %c1 = arith.constant 1 : index
    %c0_11 = arith.constant 0 : index
    %c0_12 = arith.constant 0 : index
    %13 = vector.load %arg4[%c1, %c0_11, %c0_12] : memref<3x1x128xf32, #tpu.memory_space<vmem>>, vector<1x1x128xf32>
    %14 = vector.shape_cast %13 : vector<1x1x128xf32> to vector<1x128xf32>
    %15 = vector.broadcast %14 : vector<1x128xf32> to vector<16x128xf32>
    %16 = arith.addf %12, %15 : vector<16x128xf32>
    %cst_13 = arith.constant 0.000000e+00 : f32
    %17 = vector.broadcast %cst_13 : f32 to vector<16x128xf32>
    %18 = arith.maximumf %16, %17 : vector<16x128xf32>
    %19 = arith.truncf %18 : vector<16x128xf32> to vector<16x128xbf16>
    %c1_14 = arith.constant 1 : index
    %c0_15 = arith.constant 0 : index
    %c0_16 = arith.constant 0 : index
    %20 = vector.load %arg3[%c1_14, %c0_15, %c0_16] : memref<2x128x128xbf16, #tpu.memory_space<vmem>>, vector<1x128x128xbf16>
    %21 = vector.shape_cast %20 : vector<1x128x128xbf16> to vector<128x128xbf16>
    %cst_17 = arith.constant dense<0.000000e+00> : vector<16x128xf32>
    %22 = tpu.matmul %19, %21, %cst_17 {dimension_numbers = #tpu.dot_dimension_numbers<[1], [0], [0], [1], [0, 0, 1, 1], [], []>} : vector<16x128xbf16>, vector<128x128xbf16>, vector<16x128xf32> -> vector<16x128xf32>
    %c2 = arith.constant 2 : index
    %c0_18 = arith.constant 0 : index
    %c0_19 = arith.constant 0 : index
    %23 = vector.load %arg4[%c2, %c0_18, %c0_19] : memref<3x1x128xf32, #tpu.memory_space<vmem>>, vector<1x1x128xf32>
    %24 = vector.shape_cast %23 : vector<1x1x128xf32> to vector<1x128xf32>
    %25 = vector.broadcast %24 : vector<1x128xf32> to vector<16x128xf32>
    %26 = arith.addf %22, %25 : vector<16x128xf32>
    %cst_20 = arith.constant 0.000000e+00 : f32
    %27 = vector.broadcast %cst_20 : f32 to vector<16x128xf32>
    %28 = arith.maximumf %26, %27 : vector<16x128xf32>
    %c0_21 = arith.constant 0 : index
    %c0_22 = arith.constant 0 : index
    %29 = vector.load %arg5[%c0_21, %c0_22] : memref<16x128xf32, #tpu.memory_space<vmem>>, vector<16x128xf32>
    tpu.vector_store %arg5[%c0_21, %c0_22], %28 {strides = array<i32>} : memref<16x128xf32, #tpu.memory_space<vmem>>, vector<16x128xf32>,
    return
  }
  func.func @transform_0(%arg0: i32) -> (i32, i32) {
    %c0_i32 = arith.constant 0 : i32
    %c0_i32_0 = arith.constant 0 : i32
    return %arg0, %c0_i32 : i32, i32
  }
  func.func @transform_1(%arg0: i32) -> (i32, i32) {
    %c0_i32 = arith.constant 0 : i32
    %c0_i32_0 = arith.constant 0 : i32
    %c0_i32_1 = arith.constant 0 : i32
    return %c0_i32, %c0_i32_0 : i32, i32
  }
  func.func @transform_2(%arg0: i32) -> (i32, i32, i32) {
    %c0_i32 = arith.constant 0 : i32
    %c0_i32_0 = arith.constant 0 : i32
    %c0_i32_1 = arith.constant 0 : i32
    %c0_i32_2 = arith.constant 0 : i32
    return %c0_i32, %c0_i32_0, %c0_i32_1 : i32, i32, i32
  }
  func.func @transform_3(%arg0: i32) -> (i32, i32, i32) {
    %c0_i32 = arith.constant 0 : i32
    %c0_i32_0 = arith.constant 0 : i32
    %c0_i32_1 = arith.constant 0 : i32
    %c0_i32_2 = arith.constant 0 : i32
    return %c0_i32, %c0_i32_0, %c0_i32_1 : i32, i32, i32
  }
  func.func @transform_4(%arg0: i32) -> (i32, i32) {
    %c0_i32 = arith.constant 0 : i32
    %c0_i32_0 = arith.constant 0 : i32
    return %arg0, %c0_i32 : i32, i32
  }
}

</mosaic_0001>

<llo_original>
// kernel: _forward_resident.1
$region0: #{_forward_resident.1}
  #allocation0 [shape = 'u32[]', space=smem, size = 0x4, offset = 0x4, fixed_abs, tag = 'smem constant byte address 0x4 - core index']
  #allocation1 [shape = 'u32[144,128]{1,0:T(1,128)}', space=vmem, size = 0x12000, scoped, tag = 'internal scratch']
  %s0 = inlined_call_operand.vmem [shape: bf16[16,128], index: 0, kind: input, shape index: {}]
  %s1 = inlined_call_operand.hbm [shape: bf16[128,128], index: 1, kind: input, shape index: {}]
  %s2 = inlined_call_operand.hbm [shape: bf16[2,128,128], index: 2, kind: input, shape index: {}]
  %s3 = inlined_call_operand.vmem [shape: f32[3,1,128], index: 3, kind: input, shape index: {}]
  %s4 = inlined_call_operand.vmem [shape: f32[16,128], index: 4, kind: output, shape index: {}]
  %s5 = sld [smem:[#allocation0]]
  $region34: #{_forward_resident.1} parent=0
    _
  %s7 = ssub.s32 1, %s5
  %s8 = scalar_select 0, %s7, %s5
  $region1: #{_forward_resident.1} parent=0
    #allocation2 [shape = 'u8[32768]{0}', space=vmem, size = 0x8000, scoped, tag = 'input window, operand 1, single buffered']
    #allocation3 [shape = 's32[1]{0}', space=sflag, size = 0x4, scoped, tag = 'scoped memory for _forward_resident.1']
    #allocation4 [shape = 'u8[65536]{0}', space=vmem, size = 0x10000, scoped, tag = 'input window, operand 2, single buffered']
    #allocation5 [shape = 's32[1]{0}', space=sflag, size = 0x4, scoped, tag = 'scoped memory for _forward_resident.1']
    %9 = vsyncpa [#allocation3], 0
    %10 = vsyncpa [#allocation5], 0
    // Predicated region
    $region2: #{_forward_resident.1} parent=1 // pred_check
      _
    $region3: #{_forward_resident.1} parent=1 // pred_check_branch
      %12 = sbr.rel (0) target = $region5
    $region4: #{_forward_resident.1} parent=1 // pred_region
      _
    $region5: #{_forward_resident.1} parent=1 // pred_fallthru
      _
    // Predicated region
    $region6: #{_forward_resident.1} parent=1 // pred_check
      _
    $region7: #{_forward_resident.1} parent=1 // pred_check_branch
      %14 = sbr.rel (0) target = $region9
    $region8: #{_forward_resident.1} parent=1 // pred_region
      %s16 = ssub.s32 1024, 1024
      %17 = vsyncadd [#allocation3], %s16
      %s18 = sshll.u32 [#allocation2], 4
      %s19 = int_to_ptr.vmem [resolvable:$true] %s18
      %24 = dma.hbm_to_vmem [thread:$0]  %s1, 1024, %s19, [#allocation3], 64, 64, 4
    $region9: #{_forward_resident.1} parent=1 // pred_fallthru
      _
    // Predicated region
    $region10: #{_forward_resident.1} parent=1 // pred_check
      _
    $region11: #{_forward_resident.1} parent=1 // pred_check_branch
      %26 = sbr.rel (0) target = $region13
    $region12: #{_forward_resident.1} parent=1 // pred_region
      %s28 = ssub.s32 2048, 2048
      %29 = vsyncadd [#allocation5], %s28
      %s30 = sshll.u32 [#allocation4], 4
      %s31 = int_to_ptr.vmem [resolvable:$true] %s30
      %36 = dma.hbm_to_vmem [thread:$0]  %s2, 2048, %s31, [#allocation5], 64, 64, 4
    $region13: #{_forward_resident.1} parent=1 // pred_fallthru
      _
    // Predicated region
    $region14: #{_forward_resident.1} parent=1 // pred_check
      _
    $region15: #{_forward_resident.1} parent=1 // pred_check_branch
      %38 = sbr.rel (0) target = $region17
    $region16: #{_forward_resident.1} parent=1 // pred_region
      _
    $region17: #{_forward_resident.1} parent=1 // pred_fallthru
      _
    // Predicated region
    $region18: #{_forward_resident.1} parent=1 // pred_check
      _
    $region19: #{_forward_resident.1} parent=1 // pred_check_branch
      %40 = sbr.rel (0) target = $region21
    $region20: #{_forward_resident.1} parent=1 // pred_region
      %41 = dma.done [#allocation3], 1024
    $region21: #{_forward_resident.1} parent=1 // pred_fallthru
      _
    // Predicated region
    $region22: #{_forward_resident.1} parent=1 // pred_check
      _
    $region23: #{_forward_resident.1} parent=1 // pred_check_branch
      %43 = sbr.rel (0) target = $region25
    $region24: #{_forward_resident.1} parent=1 // pred_region
      %44 = dma.done [#allocation5], 2048
    $region25: #{_forward_resident.1} parent=1 // pred_fallthru
      _
    %v46 = vld [vmem:[%s0] sm:$0xf]
    %v47 = vld [vmem:[%s0 + $0x4] sm:$0xf]
    %v48 = vld [vmem:[#allocation2] sm:$0xf]
    %v49 = vld [vmem:[#allocation2 + $0x4] sm:$0xf]
    %v50 = vld [vmem:[#allocation2 + $0x8] sm:$0xf]
    %v51 = vld [vmem:[#allocation2 + $0xc] sm:$0xf]
    %v52 = vld [vmem:[#allocation2 + $0x10] sm:$0xf]
    %v53 = vld [vmem:[#allocation2 + $0x14] sm:$0xf]
    %v54 = vld [vmem:[#allocation2 + $0x18] sm:$0xf]
    %v55 = vld [vmem:[#allocation2 + $0x1c] sm:$0xf]
    %v56 = vld [vmem:[#allocation2 + $0x20] sm:$0xf]
    %v57 = vld [vmem:[#allocation2 + $0x24] sm:$0xf]
    %v58 = vld [vmem:[#allocation2 + $0x28] sm:$0xf]
    %v59 = vld [vmem:[#allocation2 + $0x2c] sm:$0xf]
    %v60 = vld [vmem:[#allocation2 + $0x30] sm:$0xf]
    %v61 = vld [vmem:[#allocation2 + $0x34] sm:$0xf]
    %v62 = vld [vmem:[#allocation2 + $0x38] sm:$0xf]
    %v63 = vld [vmem:[#allocation2 + $0x3c] sm:$0xf]
    %v64 = vld [vmem:[%s3] sm:$0x1]
    %v66 = vlaneseq
    %v67 = vshrl.u32 %v66, 7
    %v68 = vsub.s32 0, %v67
    %v69 = vrot.slane %v64, %v68
    %v73 = vunpack.c.l.b16 %v46
    %v74 = vunpack.c.l.b16 %v47
    %v75 = vpack.c.b16 %v74, %v73
    %v93 = vunpack.c.l.b16 %v48
    %v94 = vunpack.c.l.b16 %v49
    %v95 = vunpack.c.l.b16 %v50
    %v96 = vunpack.c.l.b16 %v51
    %v97 = vunpack.c.l.b16 %v52
    %v98 = vunpack.c.l.b16 %v53
    %v99 = vunpack.c.l.b16 %v54
    %v100 = vunpack.c.l.b16 %v55
    %v101 = vunpack.c.l.b16 %v56
    %v102 = vunpack.c.l.b16 %v57
    %v103 = vunpack.c.l.b16 %v58
    %v104 = vunpack.c.l.b16 %v59
    %v105 = vunpack.c.l.b16 %v60
    %v106 = vunpack.c.l.b16 %v61
    %v107 = vunpack.c.l.b16 %v62
    %v108 = vunpack.c.l.b16 %v63
    %v109 = vpack.c.b16 %v94, %v93
    %v110 = vpack.c.b16 %v96, %v95
    %v111 = vpack.c.b16 %v98, %v97
    %v112 = vpack.c.b16 %v100, %v99
    %v113 = vpack.c.b16 %v102, %v101
    %v114 = vpack.c.b16 %v104, %v103
    %v115 = vpack.c.b16 %v106, %v105
    %v116 = vpack.c.b16 %v108, %v107
    %125 = vmatprep.subr.bf16.mxu0 0
    %126 = vmatpush1.bf16.msra.mxu0 %v116
    %127 = vmatprep.subr.bf16.mxu0 0
    %128 = vmatpush1.bf16.msra.mxu0 %v115
    %129 = vmatprep.subr.bf16.mxu0 0
    %130 = vmatpush1.bf16.msra.mxu0 %v114
    %131 = vmatprep.subr.bf16.mxu0 0
    %132 = vmatpush1.bf16.msra.mxu0 %v113
    %133 = vmatprep.subr.bf16.mxu0 0
    %134 = vmatpush1.bf16.msra.mxu0 %v112
    %135 = vmatprep.subr.bf16.mxu0 0
    %136 = vmatpush1.bf16.msra.mxu0 %v111
    %137 = vmatprep.subr.bf16.mxu0 0
    %138 = vmatpush1.bf16.msra.mxu0 %v110
    %139 = vmatprep.subr.bf16.mxu0 0
    %140 = vmatpush1.bf16.msra.mxu0 %v109
    %141 = vmatprep.subr.bf16.mxu0 0
    %142 = vmatpush2.bf16.msra.mxu0 0
    %143 = vmatprep.subr.bf16.mxu0 0
    %144 = vmatpush2.bf16.msra.mxu0 0
    %145 = vmatprep.subr.bf16.mxu0 0
    %146 = vmatpush2.bf16.msra.mxu0 0
    %147 = vmatprep.subr.bf16.mxu0 0
    %148 = vmatpush2.bf16.msra.mxu0 0
    %149 = vmatprep.subr.bf16.mxu0 0
    %150 = vmatpush2.bf16.msra.mxu0 0
    %151 = vmatprep.subr.bf16.mxu0 0
    %152 = vmatpush2.bf16.msra.mxu0 0
    %153 = vmatprep.subr.bf16.mxu0 0
    %154 = vmatpush2.bf16.msra.mxu0 0
    %155 = vmatprep.subr.bf16.mxu0 0
    %156 = vmatpush2.bf16.msra.mxu0 0
    %157 = vmatprep.mubr.bf16.mxu0 0
    %158 = vmatmul.mubr.bf16.gmra.mxu0 %v75
    %v159 = vpop.f32.mrf.mxu0
    %v160 = vadd.f32 %v69, %v159
    %v161 = vpop.f32.mrf.mxu0
    %v162 = vpop.f32.mrf.mxu0
    %v163 = vadd.f32 %v69, %v162
    %v164 = vpop.f32.mrf.mxu0
    %165 = vdwg.mxu0
    %v166 = vmax.f32 %v160, 0.0
    %v167 = vmax.f32 %v163, 0.0
    %v168 = vpack.c.bf16 %v167, %v166
    %v169 = vld [vmem:[#allocation4] sm:$0xf]
    %v170 = vld [vmem:[#allocation4 + $0x4] sm:$0xf]
    %v171 = vld [vmem:[#allocation4 + $0x8] sm:$0xf]
    %v172 = vld [vmem:[#allocation4 + $0xc] sm:$0xf]
    %v173 = vld [vmem:[#allocation4 + $0x10] sm:$0xf]
    %v174 = vld [vmem:[#allocation4 + $0x14] sm:$0xf]
    %v175 = vld [vmem:[#allocation4 + $0x18] sm:$0xf]
    %v176 = vld [vmem:[#allocation4 + $0x1c] sm:$0xf]
    %v177 = vld [vmem:[#allocation4 + $0x20] sm:$0xf]
    %v178 = vld [vmem:[#allocation4 + $0x24] sm:$0xf]
    %v179 = vld [vmem:[#allocation4 + $0x28] sm:$0xf]
    %v180 = vld [vmem:[#allocation4 + $0x2c] sm:$0xf]
    %v181 = vld [vmem:[#allocation4 + $0x30] sm:$0xf]
    %v182 = vld [vmem:[#allocation4 + $0x34] sm:$0xf]
    %v183 = vld [vmem:[#allocation4 + $0x38] sm:$0xf]
    %v184 = vld [vmem:[#allocation4 + $0x3c] sm:$0xf]
    %s185 = scalar_lea.vmem %s3, 1
    %v186 = vld [vmem:[%s185] sm:$0x1]
    %v188 = vlaneseq
    %v189 = vshrl.u32 %v188, 7
    %v190 = vsub.s32 0, %v189
    %v191 = vrot.slane %v186, %v190
    %v209 = vunpack.c.l.b16 %v169
    %v210 = vunpack.c.l.b16 %v170
    %v211 = vunpack.c.l.b16 %v171
    %v212 = vunpack.c.l.b16 %v172
    %v213 = vunpack.c.l.b16 %v173
    %v214 = vunpack.c.l.b16 %v174
    %v215 = vunpack.c.l.b16 %v175
    %v216 = vunpack.c.l.b16 %v176
    %v217 = vunpack.c.l.b16 %v177
    %v218 = vunpack.c.l.b16 %v178
    %v219 = vunpack.c.l.b16 %v179
    %v220 = vunpack.c.l.b16 %v180
    %v221 = vunpack.c.l.b16 %v181
    %v222 = vunpack.c.l.b16 %v182
    %v223 = vunpack.c.l.b16 %v183
    %v224 = vunpack.c.l.b16 %v184
    %v225 = vpack.c.b16 %v210, %v209
    %v226 = vpack.c.b16 %v212, %v211
    %v227 = vpack.c.b16 %v214, %v213
    %v228 = vpack.c.b16 %v216, %v215
    %v229 = vpack.c.b16 %v218, %v217
    %v230 = vpack.c.b16 %v220, %v219
    %v231 = vpack.c.b16 %v222, %v221
    %v232 = vpack.c.b16 %v224, %v223
    %241 = vmatprep.subr.bf16.mxu0 0
    %242 = vmatpush1.bf16.msra.mxu0 %v232
    %243 = vmatprep.subr.bf16.mxu0 0
    %244 = vmatpush1.bf16.msra.mxu0 %v231
    %245 = vmatprep.subr.bf16.mxu0 0
    %246 = vmatpush1.bf16.msra.mxu0 %v230
    %247 = vmatprep.subr.bf16.mxu0 0
    %248 = vmatpush1.bf16.msra.mxu0 %v229
    %249 = vmatprep.subr.bf16.mxu0 0
    %250 = vmatpush1.bf16.msra.mxu0 %v228
    %251 = vmatprep.subr.bf16.mxu0 0
    %252 = vmatpush1.bf16.msra.mxu0 %v227
    %253 = vmatprep.subr.bf16.mxu0 0
    %254 = vmatpush1.bf16.msra.mxu0 %v226
    %255 = vmatprep.subr.bf16.mxu0 0
    %256 = vmatpush1.bf16.msra.mxu0 %v225
    %257 = vmatprep.subr.bf16.mxu0 0
    %258 = vmatpush2.bf16.msra.mxu0 0
    %259 = vmatprep.subr.bf16.mxu0 0
    %260 = vmatpush2.bf16.msra.mxu0 0
    %261 = vmatprep.subr.bf16.mxu0 0
    %262 = vmatpush2.bf16.msra.mxu0 0
    %263 = vmatprep.subr.bf16.mxu0 0
    %264 = vmatpush2.bf16.msra.mxu0 0
    %265 = vmatprep.subr.bf16.mxu0 0
    %266 = vmatpush2.bf16.msra.mxu0 0
    %267 = vmatprep.subr.bf16.mxu0 0
    %268 = vmatpush2.bf16.msra.mxu0 0
    %269 = vmatprep.subr.bf16.mxu0 0
    %270 = vmatpush2.bf16.msra.mxu0 0
    %271 = vmatprep.subr.bf16.mxu0 0
    %272 = vmatpush2.bf16.msra.mxu0 0
    %273 = vmatprep.mubr.bf16.mxu0 0
    %274 = vmatmul.mubr.bf16.gmra.mxu0 %v168
    %v275 = vpop.f32.mrf.mxu0
    %v276 = vadd.f32 %v191, %v275
    %v277 = vpop.f32.mrf.mxu0
    %v278 = vpop.f32.mrf.mxu0
    %v279 = vadd.f32 %v191, %v278
    %v280 = vpop.f32.mrf.mxu0
    %281 = vdwg.mxu0
    %v282 = vmax.f32 %v276, 0.0
    %v283 = vmax.f32 %v279, 0.0
    %v284 = vpack.c.bf16 %v283, %v282
    %s285 = scalar_lea.vmem [#allocation4], 64
    %v286 = vld [vmem:[%s285] sm:$0xf]
    %v287 = vld [vmem:[%s285 + $0x4] sm:$0xf]
    %v288 = vld [vmem:[%s285 + $0x8] sm:$0xf]
    %v289 = vld [vmem:[%s285 + $0xc] sm:$0xf]
    %v290 = vld [vmem:[%s285 + $0x10] sm:$0xf]
    %v291 = vld [vmem:[%s285 + $0x14] sm:$0xf]
    %v292 = vld [vmem:[%s285 + $0x18] sm:$0xf]
    %v293 = vld [vmem:[%s285 + $0x1c] sm:$0xf]
    %v294 = vld [vmem:[%s285 + $0x20] sm:$0xf]
    %v295 = vld [vmem:[%s285 + $0x24] sm:$0xf]
    %v296 = vld [vmem:[%s285 + $0x28] sm:$0xf]
    %v297 = vld [vmem:[%s285 + $0x2c] sm:$0xf]
    %v298 = vld [vmem:[%s285 + $0x30] sm:$0xf]
    %v299 = vld [vmem:[%s285 + $0x34] sm:$0xf]
    %v300 = vld [vmem:[%s285 + $0x38] sm:$0xf]
    %v301 = vld [vmem:[%s285 + $0x3c] sm:$0xf]
    %s302 = scalar_lea.vmem %s3, 2
    %v303 = vld [vmem:[%s302] sm:$0x1]
    %v305 = vlaneseq
    %v306 = vshrl.u32 %v305, 7
    %v307 = vsub.s32 0, %v306
    %v308 = vrot.slane %v303, %v307
    %v326 = vunpack.c.l.b16 %v286
    %v327 = vunpack.c.l.b16 %v287
    %v328 = vunpack.c.l.b16 %v288
    %v329 = vunpack.c.l.b16 %v289
    %v330 = vunpack.c.l.b16 %v290
    %v331 = vunpack.c.l.b16 %v291
    %v332 = vunpack.c.l.b16 %v292
    %v333 = vunpack.c.l.b16 %v293
    %v334 = vunpack.c.l.b16 %v294
    %v335 = vunpack.c.l.b16 %v295
    %v336 = vunpack.c.l.b16 %v296
    %v337 = vunpack.c.l.b16 %v297
    %v338 = vunpack.c.l.b16 %v298
    %v339 = vunpack.c.l.b16 %v299
    %v340 = vunpack.c.l.b16 %v300
    %v341 = vunpack.c.l.b16 %v301
    %v342 = vpack.c.b16 %v327, %v326
    %v343 = vpack.c.b16 %v329, %v328
    %v344 = vpack.c.b16 %v331, %v330
    %v345 = vpack.c.b16 %v333, %v332
    %v346 = vpack.c.b16 %v335, %v334
    %v347 = vpack.c.b16 %v337, %v336
    %v348 = vpack.c.b16 %v339, %v338
    %v349 = vpack.c.b16 %v341, %v340
    %358 = vmatprep.subr.bf16.mxu0 0
    %359 = vmatpush1.bf16.msra.mxu0 %v349
    %360 = vmatprep.subr.bf16.mxu0 0
    %361 = vmatpush1.bf16.msra.mxu0 %v348
    %362 = vmatprep.subr.bf16.mxu0 0
    %363 = vmatpush1.bf16.msra.mxu0 %v347
    %364 = vmatprep.subr.bf16.mxu0 0
    %365 = vmatpush1.bf16.msra.mxu0 %v346
    %366 = vmatprep.subr.bf16.mxu0 0
    %367 = vmatpush1.bf16.msra.mxu0 %v345
    %368 = vmatprep.subr.bf16.mxu0 0
    %369 = vmatpush1.bf16.msra.mxu0 %v344
    %370 = vmatprep.subr.bf16.mxu0 0
    %371 = vmatpush1.bf16.msra.mxu0 %v343
    %372 = vmatprep.subr.bf16.mxu0 0
    %373 = vmatpush1.bf16.msra.mxu0 %v342
    %374 = vmatprep.subr.bf16.mxu0 0
    %375 = vmatpush2.bf16.msra.mxu0 0
    %376 = vmatprep.subr.bf16.mxu0 0
    %377 = vmatpush2.bf16.msra.mxu0 0
    %378 = vmatprep.subr.bf16.mxu0 0
    %379 = vmatpush2.bf16.msra.mxu0 0
    %380 = vmatprep.subr.bf16.mxu0 0
    %381 = vmatpush2.bf16.msra.mxu0 0
    %382 = vmatprep.subr.bf16.mxu0 0
    %383 = vmatpush2.bf16.msra.mxu0 0
    %384 = vmatprep.subr.bf16.mxu0 0
    %385 = vmatpush2.bf16.msra.mxu0 0
    %386 = vmatprep.subr.bf16.mxu0 0
    %387 = vmatpush2.bf16.msra.mxu0 0
    %388 = vmatprep.subr.bf16.mxu0 0
    %389 = vmatpush2.bf16.msra.mxu0 0
    %390 = vmatprep.mubr.bf16.mxu0 0
    %391 = vmatmul.mubr.bf16.gmra.mxu0 %v284
    %v392 = vpop.f32.mrf.mxu0
    %v393 = vadd.f32 %v308, %v392
    %v394 = vpop.f32.mrf.mxu0
    %v395 = vpop.f32.mrf.mxu0
    %v396 = vadd.f32 %v308, %v395
    %v397 = vpop.f32.mrf.mxu0
    %398 = vdwg.mxu0
    %v399 = vmax.f32 %v393, 0.0
    %v400 = vmax.f32 %v396, 0.0
    %401 = vst [vmem:[%s4] sm:$0xff] %v399
    %402 = vst [vmem:[%s4 + $0x8] sm:$0xff] %v400
    // Predicated region
    $region26: #{_forward_resident.1} parent=1 // pred_check
      _
    $region27: #{_forward_resident.1} parent=1 // pred_check_branch
      %404 = sbr.rel (0) target = $region29
    $region28: #{_forward_resident.1} parent=1 // pred_region
      _
    $region29: #{_forward_resident.1} parent=1 // pred_fallthru
      _
    // Predicated region
    $region30: #{_forward_resident.1} parent=1 // pred_check
      _
    $region31: #{_forward_resident.1} parent=1 // pred_check_branch
      %406 = sbr.rel (0) target = $region33
    $region32: #{_forward_resident.1} parent=1 // pred_region
      _
    $region33: #{_forward_resident.1} parent=1 // pred_fallthru
      _
    %407 = vsyncpa [#allocation3], 1
    %408 = vsyncpa [#allocation5], 1

</llo_original>
